<compile_context>
chip_gen: v5e
topology: v5e:2x2
jax: 0.10.0
libtpu: 0.0.40
codegen_flags: <defaults>
</compile_context>

<pallas_src>
import functools
import math

import jax
import jax.numpy as jnp
from jax.experimental import pallas as pl
from jax.experimental.pallas import tpu as pltpu

LEAKY_SLOPE = 0.01      # nn.LeakyReLU default negative_slope
LANE = 128              # TPU lane width
SUBLANE = 8             # TPU sublane width
DEFAULT_TM = 256        # batch tile (fits easily in VMEM even on v7x's 64 MiB)


def _round_up(v, m):
    return (v + m - 1) // m * m


def _fc_block_kernel(*refs, num_layers, logit, compute_dtype):
    """Fused MLP: refs = (x_ref, w0, b0, w1, b1, ..., o_ref).

    All layers execute back-to-back on the current batch tile; activations
    never leave VMEM/vregs.
    """
    x_ref = refs[0]
    o_ref = refs[-1]
    wb_refs = refs[1:-1]

    h = x_ref[...].astype(jnp.float32)
    for idx in range(num_layers):
        w = wb_refs[2 * idx][...]
        b = wb_refs[2 * idx + 1][...]
        # MXU matmul: bf16 inputs, f32 accumulation.
        acc = jnp.dot(
            h.astype(compute_dtype),
            w.astype(compute_dtype),
            preferred_element_type=jnp.float32,
        )
        acc = acc + b.astype(jnp.float32)          # broadcast (1, N) over rows
        is_last = idx == num_layers - 1
        if (not is_last) or (not logit):           # hidden layers always; last iff not logit
            acc = jnp.where(acc >= 0, acc, LEAKY_SLOPE * acc)
        h = acc
    o_ref[...] = h.astype(o_ref.dtype)


def init_fc_params(key, dims, dtype=jnp.float32):
    """Parameters matching nn.Linear(in, out) layout, stored as (in, out)."""
    params = []
    for in_dim, out_dim in zip(dims[:-1], dims[1:]):
        key, kw, kb = jax.random.split(key, 3)
        bound = 1.0 / math.sqrt(in_dim)            # PyTorch default Linear init bound
        w = jax.random.uniform(kw, (in_dim, out_dim), dtype, -bound, bound)
        b = jax.random.uniform(kb, (1, out_dim), dtype, -bound, bound)
        params.append((w, b))
    return params


def pad_params(params, lane=LANE):
    """Zero-pad every weight/bias so K and N are multiples of 128 (lane-dense)."""
    padded = []
    for w, b in params:
        K, N = w.shape
        Kp, Np = _round_up(K, lane), _round_up(N, lane)
        wp = jnp.zeros((Kp, Np), w.dtype).at[:K, :N].set(w)
        bp = jnp.zeros((1, Np), b.dtype).at[:, :N].set(b)
        padded.append((wp, bp))
    return padded


def fc_block_forward(x, params, logit=False, tm=DEFAULT_TM,
                     compute_dtype=jnp.bfloat16):
    """Forward pass of FCBlock as a single fused Pallas call."""
    num_layers = len(params)
    M, K = x.shape
    assert K == params[0][0].shape[0]
    N_last = params[-1][0].shape[1]

    # TODO(synk): padding params per call is redundant; hoist to init for reuse.
    padded = pad_params(params)
    K_pad = padded[0][0].shape[0]
    N_last_pad = padded[-1][0].shape[1]

    # Batch tiling: TM capped by the (padded) batch, always a sublane multiple.
    TM = min(tm, _round_up(M, SUBLANE))
    M_pad = _round_up(M, TM)
    x_pad = jnp.zeros((M_pad, K_pad), x.dtype).at[:M, :K].set(x)

    flat_params = []
    in_specs = [pl.BlockSpec((TM, K_pad), lambda i: (i, 0))]       # moves with grid
    for wp, bp in padded:
        flat_params += [wp, bp]
        in_specs += [
            pl.BlockSpec(wp.shape, lambda i: (0, 0)),              # VMEM-resident
            pl.BlockSpec(bp.shape, lambda i: (0, 0)),              # VMEM-resident
        ]
    out_spec = pl.BlockSpec((TM, N_last_pad), lambda i: (i, 0))

    kernel = functools.partial(
        _fc_block_kernel,
        num_layers=num_layers,
        logit=logit,
        compute_dtype=compute_dtype,
    )

    out_pad = pl.pallas_call(
        kernel,
        out_shape=jax.ShapeDtypeStruct((M_pad, N_last_pad), x.dtype),
        grid=(M_pad // TM,),
        in_specs=in_specs,
        out_specs=out_spec,
        compiler_params=pltpu.CompilerParams(
            dimension_semantics=("parallel",),     # lets v7x use both TCs
        ),
    )(x_pad, *flat_params)

    return out_pad[:M, :N_last]


def fc_block_reference(x, params, logit=False, compute_dtype=jnp.bfloat16):
    """Pure-JAX reference with the same bf16-matmul / f32-accumulate recipe."""
    num_layers = len(params)
    out = x.astype(jnp.float32)
    for idx, (w, b) in enumerate(params):
        out = jnp.dot(out.astype(compute_dtype), w.astype(compute_dtype),
                      preferred_element_type=jnp.float32)
        out = out + b.astype(jnp.float32)
        is_last = idx == num_layers - 1
        if (not is_last) or (not logit):
            out = jnp.where(out >= 0, out, LEAKY_SLOPE * out)
    return out.astype(x.dtype)


if __name__ == "__main__":
    dims = [32, 64, 48, 16]   # dims[0] = input dim, rest = per-layer output dims
    batch = 8
    key = jax.random.PRNGKey(0)
    kx, kp = jax.random.split(key)
    x = jax.random.normal(kx, (batch, dims[0]), jnp.float32)
    params = init_fc_params(kp, dims)

    out = fc_block_forward(x, params, logit=False)
    out = jax.block_until_ready(out)

    ref = fc_block_reference(x, params, logit=False)
    assert out.shape == (batch, dims[-1])
    assert jnp.allclose(out, ref, atol=5e-3, rtol=5e-3), "mismatch vs reference"

    print("KERNEL_OK")
</pallas_src>

<mosaic_0001>
module attributes {stable_mosaic.version = 11 : i64} {
  func.func @_fc_block_kernel(%arg0: i32, %arg1: memref<8x128xf32, #tpu.memory_space<vmem>>, %arg2: memref<128x128xf32, #tpu.memory_space<vmem>>, %arg3: memref<1x128xf32, #tpu.memory_space<vmem>>, %arg4: memref<128x128xf32, #tpu.memory_space<vmem>>, %arg5: memref<1x128xf32, #tpu.memory_space<vmem>>, %arg6: memref<128x128xf32, #tpu.memory_space<vmem>>, %arg7: memref<1x128xf32, #tpu.memory_space<vmem>>, %arg8: memref<8x128xf32, #tpu.memory_space<vmem>>) attributes {dimension_semantics = [#tpu.dimension_semantics<parallel>], iteration_bounds = array<i64: 1>, scalar_prefetch = 0 : i64, scratch_operands = 0 : i64, tpu.core_type = #tpu.core_type<tc>, window_params = [{transform_indices = @transform_0, window_bounds = array<i64: 8, 128>}, {pipeline_mode = #tpu.pipeline_mode<synchronous>, transform_indices = @transform_1, window_bounds = array<i64: 128, 128>}, {pipeline_mode = #tpu.pipeline_mode<synchronous>, transform_indices = @transform_2, window_bounds = array<i64: 1, 128>}, {pipeline_mode = #tpu.pipeline_mode<synchronous>, transform_indices = @transform_3, window_bounds = array<i64: 128, 128>}, {pipeline_mode = #tpu.pipeline_mode<synchronous>, transform_indices = @transform_4, window_bounds = array<i64: 1, 128>}, {pipeline_mode = #tpu.pipeline_mode<synchronous>, transform_indices = @transform_5, window_bounds = array<i64: 128, 128>}, {pipeline_mode = #tpu.pipeline_mode<synchronous>, transform_indices = @transform_6, window_bounds = array<i64: 1, 128>}, {transform_indices = @transform_7, window_bounds = array<i64: 8, 128>}]} {
    %c0 = arith.constant 0 : index
    %c0_0 = arith.constant 0 : index
    %0 = vector.load %arg1[%c0, %c0_0] : memref<8x128xf32, #tpu.memory_space<vmem>>, vector<8x128xf32>
    %c0_1 = arith.constant 0 : index
    %c0_2 = arith.constant 0 : index
    %1 = vector.load %arg2[%c0_1, %c0_2] : memref<128x128xf32, #tpu.memory_space<vmem>>, vector<128x128xf32>
    %c0_3 = arith.constant 0 : index
    %c0_4 = arith.constant 0 : index
    %2 = vector.load %arg3[%c0_3, %c0_4] : memref<1x128xf32, #tpu.memory_space<vmem>>, vector<1x128xf32>
    %3 = arith.truncf %0 : vector<8x128xf32> to vector<8x128xbf16>
    %4 = arith.truncf %1 : vector<128x128xf32> to vector<128x128xbf16>
    %cst = arith.constant dense<0.000000e+00> : vector<8x128xf32>
    %5 = tpu.matmul %3, %4, %cst {dimension_numbers = #tpu.dot_dimension_numbers<[1], [0], [0], [1], [0, 0, 1, 1], [], []>} : vector<8x128xbf16>, vector<128x128xbf16>, vector<8x128xf32> -> vector<8x128xf32>
    %6 = vector.broadcast %2 : vector<1x128xf32> to vector<8x128xf32>
    %7 = arith.addf %5, %6 : vector<8x128xf32>
    %cst_5 = arith.constant 0.000000e+00 : f32
    %8 = vector.broadcast %cst_5 : f32 to vector<8x128xf32>
    %9 = arith.cmpf oge, %7, %8 : vector<8x128xf32>
    %cst_6 = arith.constant 0.00999999977 : f32
    %10 = vector.broadcast %cst_6 : f32 to vector<8x128xf32>
    %11 = arith.mulf %10, %7 : vector<8x128xf32>
    %12 = arith.select %9, %7, %11 : vector<8x128xi1>, vector<8x128xf32>
    %c0_7 = arith.constant 0 : index
    %c0_8 = arith.constant 0 : index
    %13 = vector.load %arg4[%c0_7, %c0_8] : memref<128x128xf32, #tpu.memory_space<vmem>>, vector<128x128xf32>
    %c0_9 = arith.constant 0 : index
    %c0_10 = arith.constant 0 : index
    %14 = vector.load %arg5[%c0_9, %c0_10] : memref<1x128xf32, #tpu.memory_space<vmem>>, vector<1x128xf32>
    %15 = arith.truncf %12 : vector<8x128xf32> to vector<8x128xbf16>
    %16 = arith.truncf %13 : vector<128x128xf32> to vector<128x128xbf16>
    %cst_11 = arith.constant dense<0.000000e+00> : vector<8x128xf32>
    %17 = tpu.matmul %15, %16, %cst_11 {dimension_numbers = #tpu.dot_dimension_numbers<[1], [0], [0], [1], [0, 0, 1, 1], [], []>} : vector<8x128xbf16>, vector<128x128xbf16>, vector<8x128xf32> -> vector<8x128xf32>
    %18 = vector.broadcast %14 : vector<1x128xf32> to vector<8x128xf32>
    %19 = arith.addf %17, %18 : vector<8x128xf32>
    %cst_12 = arith.constant 0.000000e+00 : f32
    %20 = vector.broadcast %cst_12 : f32 to vector<8x128xf32>
    %21 = arith.cmpf oge, %19, %20 : vector<8x128xf32>
    %cst_13 = arith.constant 0.00999999977 : f32
    %22 = vector.broadcast %cst_13 : f32 to vector<8x128xf32>
    %23 = arith.mulf %22, %19 : vector<8x128xf32>
    %24 = arith.select %21, %19, %23 : vector<8x128xi1>, vector<8x128xf32>
    %c0_14 = arith.constant 0 : index
    %c0_15 = arith.constant 0 : index
    %25 = vector.load %arg6[%c0_14, %c0_15] : memref<128x128xf32, #tpu.memory_space<vmem>>, vector<128x128xf32>
    %c0_16 = arith.constant 0 : index
    %c0_17 = arith.constant 0 : index
    %26 = vector.load %arg7[%c0_16, %c0_17] : memref<1x128xf32, #tpu.memory_space<vmem>>, vector<1x128xf32>
    %27 = arith.truncf %24 : vector<8x128xf32> to vector<8x128xbf16>
    %28 = arith.truncf %25 : vector<128x128xf32> to vector<128x128xbf16>
    %cst_18 = arith.constant dense<0.000000e+00> : vector<8x128xf32>
    %29 = tpu.matmul %27, %28, %cst_18 {dimension_numbers = #tpu.dot_dimension_numbers<[1], [0], [0], [1], [0, 0, 1, 1], [], []>} : vector<8x128xbf16>, vector<128x128xbf16>, vector<8x128xf32> -> vector<8x128xf32>
    %30 = vector.broadcast %26 : vector<1x128xf32> to vector<8x128xf32>
    %31 = arith.addf %29, %30 : vector<8x128xf32>
    %cst_19 = arith.constant 0.000000e+00 : f32
    %32 = vector.broadcast %cst_19 : f32 to vector<8x128xf32>
    %33 = arith.cmpf oge, %31, %32 : vector<8x128xf32>
    %cst_20 = arith.constant 0.00999999977 : f32
    %34 = vector.broadcast %cst_20 : f32 to vector<8x128xf32>
    %35 = arith.mulf %34, %31 : vector<8x128xf32>
    %36 = arith.select %33, %31, %35 : vector<8x128xi1>, vector<8x128xf32>
    %c0_21 = arith.constant 0 : index
    %c0_22 = arith.constant 0 : index
    %37 = vector.load %arg8[%c0_21, %c0_22] : memref<8x128xf32, #tpu.memory_space<vmem>>, vector<8x128xf32>
    tpu.vector_store %arg8[%c0_21, %c0_22], %36 {strides = array<i32>} : memref<8x128xf32, #tpu.memory_space<vmem>>, vector<8x128xf32>,
    return
  }
  func.func @transform_0(%arg0: i32) -> (i32, i32) {
    %c0_i32 = arith.constant 0 : i32
    %c0_i32_0 = arith.constant 0 : i32
    return %arg0, %c0_i32 : i32, i32
  }
  func.func @transform_1(%arg0: i32) -> (i32, i32) {
    %c0_i32 = arith.constant 0 : i32
    %c0_i32_0 = arith.constant 0 : i32
    %c0_i32_1 = arith.constant 0 : i32
    return %c0_i32, %c0_i32_0 : i32, i32
  }
  func.func @transform_2(%arg0: i32) -> (i32, i32) {
    %c0_i32 = arith.constant 0 : i32
    %c0_i32_0 = arith.constant 0 : i32
    %c0_i32_1 = arith.constant 0 : i32
    return %c0_i32, %c0_i32_0 : i32, i32
  }
  func.func @transform_3(%arg0: i32) -> (i32, i32) {
    %c0_i32 = arith.constant 0 : i32
    %c0_i32_0 = arith.constant 0 : i32
    %c0_i32_1 = arith.constant 0 : i32
    return %c0_i32, %c0_i32_0 : i32, i32
  }
  func.func @transform_4(%arg0: i32) -> (i32, i32) {
    %c0_i32 = arith.constant 0 : i32
    %c0_i32_0 = arith.constant 0 : i32
    %c0_i32_1 = arith.constant 0 : i32
    return %c0_i32, %c0_i32_0 : i32, i32
  }
  func.func @transform_5(%arg0: i32) -> (i32, i32) {
    %c0_i32 = arith.constant 0 : i32
    %c0_i32_0 = arith.constant 0 : i32
    %c0_i32_1 = arith.constant 0 : i32
    return %c0_i32, %c0_i32_0 : i32, i32
  }
  func.func @transform_6(%arg0: i32) -> (i32, i32) {
    %c0_i32 = arith.constant 0 : i32
    %c0_i32_0 = arith.constant 0 : i32
    %c0_i32_1 = arith.constant 0 : i32
    return %c0_i32, %c0_i32_0 : i32, i32
  }
  func.func @transform_7(%arg0: i32) -> (i32, i32) {
    %c0_i32 = arith.constant 0 : i32
    %c0_i32_0 = arith.constant 0 : i32
    return %arg0, %c0_i32 : i32, i32
  }
}

</mosaic_0001>

<llo_original>
// kernel: tpu_custom_call.1
$region0: #{tpu_custom_call.1}
  #allocation0 [shape = 'u32[]', space=smem, size = 0x4, offset = 0x4, fixed_abs, tag = 'smem constant byte address 0x4 - core index']
  #allocation1 [shape = 'u32[72,128]{1,0:T(1,128)}', space=vmem, size = 0x9000, scoped, tag = 'internal scratch']
  %s0 = inlined_call_operand.hbm [shape: f32[8,128], index: 0, kind: input, shape index: {}]
  %s1 = inlined_call_operand.hbm [shape: f32[128,128], index: 1, kind: input, shape index: {}]
  %s2 = inlined_call_operand.vmem [shape: f32[1,128], index: 2, kind: input, shape index: {}]
  %s3 = inlined_call_operand.hbm [shape: f32[128,128], index: 3, kind: input, shape index: {}]
  %s4 = inlined_call_operand.vmem [shape: f32[1,128], index: 4, kind: input, shape index: {}]
  %s5 = inlined_call_operand.hbm [shape: f32[128,128], index: 5, kind: input, shape index: {}]
  %s6 = inlined_call_operand.vmem [shape: f32[1,128], index: 6, kind: input, shape index: {}]
  %s7 = inlined_call_operand.hbm [shape: f32[8,128], index: 7, kind: output, shape index: {}]
  %s8 = sld [smem:[#allocation0]]
  $region54: #{tpu_custom_call.1} parent=0
    _
  %s10 = ssub.s32 1, %s8
  %s11 = scalar_select 0, %s10, %s8
  $region1: #{tpu_custom_call.1} parent=0
    #allocation2 [shape = 'u8[4096]{0}', space=vmem, size = 0x1000, scoped, tag = 'input window, operand 0, single buffered']
    #allocation3 [shape = 's32[1]{0}', space=sflag, size = 0x4, scoped, tag = 'scoped memory for tpu_custom_call.1']
    #allocation4 [shape = 's32[1]{0}', space=sflag, size = 0x4, scoped, tag = 'scoped memory for tpu_custom_call.1']
    #allocation5 [shape = 'u8[65536]{0}', space=vmem, size = 0x10000, scoped, tag = 'input window, operand 1, single buffered']
    #allocation6 [shape = 's32[1]{0}', space=sflag, size = 0x4, scoped, tag = 'scoped memory for tpu_custom_call.1']
    #allocation7 [shape = 'u8[65536]{0}', space=vmem, size = 0x10000, scoped, tag = 'input window, operand 3, single buffered']
    #allocation8 [shape = 'u8[65536]{0}', space=vmem, size = 0x10000, scoped, tag = 'input window, operand 5, single buffered']
    #allocation9 [shape = 's32[1]{0}', space=sflag, size = 0x4, scoped, tag = 'scoped memory for tpu_custom_call.1']
    #allocation10 [shape = 'u8[4096]{0}', space=vmem, size = 0x1000, scoped, tag = 'output window, operand 0, single buffered']
    %12 = vsyncpa [#allocation3], 0
    %13 = vsyncpa [#allocation6], 0
    %14 = vsyncpa [#allocation9], 0
    %15 = vsyncpa [#allocation4], 0
    // Predicated region
    $region2: #{tpu_custom_call.1} parent=1 // pred_check
      _
    $region3: #{tpu_custom_call.1} parent=1 // pred_check_branch
      %17 = sbr.rel (0) target = $region5
    $region4: #{tpu_custom_call.1} parent=1 // pred_region
      %19 = vsyncadd [#allocation3], 0
      %s21 = sshll.u32 %s0, 4
      %s22 = int_to_ptr.hbm [resolvable:$true] %s21
      %s23 = sshll.u32 [#allocation2], 4
      %s24 = int_to_ptr.vmem [resolvable:$true] %s23
      %26 = dma.hbm_to_vmem [thread:$0]  %s22, 128, %s24, [#allocation3]
    $region5: #{tpu_custom_call.1} parent=1 // pred_fallthru
      _
    // Predicated region
    $region6: #{tpu_custom_call.1} parent=1 // pred_check
      _
    $region7: #{tpu_custom_call.1} parent=1 // pred_check_branch
      %28 = sbr.rel (0) target = $region9
    $region8: #{tpu_custom_call.1} parent=1 // pred_region
      %30 = vsyncadd [#allocation6], 0
      %s31 = sshll.u32 %s1, 4
      %s32 = int_to_ptr.hbm [resolvable:$true] %s31
      %s33 = sshll.u32 [#allocation5], 4
      %s34 = int_to_ptr.vmem [resolvable:$true] %s33
      %39 = dma.hbm_to_vmem [thread:$0]  %s32, 2048, %s34, [#allocation6], 128, 128, 8
    $region9: #{tpu_custom_call.1} parent=1 // pred_fallthru
      _
    // Predicated region
    $region10: #{tpu_custom_call.1} parent=1 // pred_check
      _
    $region11: #{tpu_custom_call.1} parent=1 // pred_check_branch
      %41 = sbr.rel (0) target = $region13
    $region12: #{tpu_custom_call.1} parent=1 // pred_region
      _
    $region13: #{tpu_custom_call.1} parent=1 // pred_fallthru
      _
    // Predicated region
    $region14: #{tpu_custom_call.1} parent=1 // pred_check
      _
    $region15: #{tpu_custom_call.1} parent=1 // pred_check_branch
      %43 = sbr.rel (0) target = $region17
    $region16: #{tpu_custom_call.1} parent=1 // pred_region
      %45 = vsyncadd [#allocation6], 0
      %s46 = sshll.u32 %s3, 4
      %s47 = int_to_ptr.hbm [resolvable:$true] %s46
      %s48 = sshll.u32 [#allocation7], 4
      %s49 = int_to_ptr.vmem [resolvable:$true] %s48
      %54 = dma.hbm_to_vmem [thread:$0]  %s47, 2048, %s49, [#allocation6], 128, 128, 8
    $region17: #{tpu_custom_call.1} parent=1 // pred_fallthru
      _
    // Predicated region
    $region18: #{tpu_custom_call.1} parent=1 // pred_check
      _
    $region19: #{tpu_custom_call.1} parent=1 // pred_check_branch
      %56 = sbr.rel (0) target = $region21
    $region20: #{tpu_custom_call.1} parent=1 // pred_region
      _
    $region21: #{tpu_custom_call.1} parent=1 // pred_fallthru
      _
    // Predicated region
    $region22: #{tpu_custom_call.1} parent=1 // pred_check
      _
    $region23: #{tpu_custom_call.1} parent=1 // pred_check_branch
      %58 = sbr.rel (0) target = $region25
    $region24: #{tpu_custom_call.1} parent=1 // pred_region
      %60 = vsyncadd [#allocation9], 0
      %s61 = sshll.u32 %s5, 4
      %s62 = int_to_ptr.hbm [resolvable:$true] %s61
      %s63 = sshll.u32 [#allocation8], 4
      %s64 = int_to_ptr.vmem [resolvable:$true] %s63
      %69 = dma.hbm_to_vmem [thread:$0]  %s62, 2048, %s64, [#allocation9], 128, 128, 8
    $region25: #{tpu_custom_call.1} parent=1 // pred_fallthru
      _
    // Predicated region
    $region26: #{tpu_custom_call.1} parent=1 // pred_check
      _
    $region27: #{tpu_custom_call.1} parent=1 // pred_check_branch
      %71 = sbr.rel (0) target = $region29
    $region28: #{tpu_custom_call.1} parent=1 // pred_region
      _
    $region29: #{tpu_custom_call.1} parent=1 // pred_fallthru
      _
    // Predicated region
    $region30: #{tpu_custom_call.1} parent=1 // pred_check
      _
    $region31: #{tpu_custom_call.1} parent=1 // pred_check_branch
      %73 = sbr.rel (0) target = $region33
    $region32: #{tpu_custom_call.1} parent=1 // pred_region
      %75 = dma.done [#allocation3], 128
    $region33: #{tpu_custom_call.1} parent=1 // pred_fallthru
      _
    // Predicated region
    $region34: #{tpu_custom_call.1} parent=1 // pred_check
      _
    $region35: #{tpu_custom_call.1} parent=1 // pred_check_branch
      %77 = sbr.rel (0) target = $region37
    $region36: #{tpu_custom_call.1} parent=1 // pred_region
      %79 = dma.done [#allocation6], 2048
    $region37: #{tpu_custom_call.1} parent=1 // pred_fallthru
      _
    // Predicated region
    $region38: #{tpu_custom_call.1} parent=1 // pred_check
      _
    $region39: #{tpu_custom_call.1} parent=1 // pred_check_branch
      %81 = sbr.rel (0) target = $region41
    $region40: #{tpu_custom_call.1} parent=1 // pred_region
      %83 = dma.done [#allocation6], 2048
    $region41: #{tpu_custom_call.1} parent=1 // pred_fallthru
      _
    // Predicated region
    $region42: #{tpu_custom_call.1} parent=1 // pred_check
      _
    $region43: #{tpu_custom_call.1} parent=1 // pred_check_branch
      %85 = sbr.rel (0) target = $region45
    $region44: #{tpu_custom_call.1} parent=1 // pred_region
      %87 = dma.done [#allocation9], 2048
    $region45: #{tpu_custom_call.1} parent=1 // pred_fallthru
      _
    %v88 = vld [vmem:[#allocation2] sm:$0xff]
    %v89 = vld [vmem:[#allocation5] sm:$0xff]
    %v90 = vld [vmem:[#allocation5 + $0x8] sm:$0xff]
    %v91 = vld [vmem:[#allocation5 + $0x10] sm:$0xff]
    %v92 = vld [vmem:[#allocation5 + $0x18] sm:$0xff]
    %v93 = vld [vmem:[#allocation5 + $0x20] sm:$0xff]
    %v94 = vld [vmem:[#allocation5 + $0x28] sm:$0xff]
    %v95 = vld [vmem:[#allocation5 + $0x30] sm:$0xff]
    %v96 = vld [vmem:[#allocation5 + $0x38] sm:$0xff]
    %v97 = vld [vmem:[#allocation5 + $0x40] sm:$0xff]
    %v98 = vld [vmem:[#allocation5 + $0x48] sm:$0xff]
    %v99 = vld [vmem:[#allocation5 + $0x50] sm:$0xff]
    %v100 = vld [vmem:[#allocation5 + $0x58] sm:$0xff]
    %v101 = vld [vmem:[#allocation5 + $0x60] sm:$0xff]
    %v102 = vld [vmem:[#allocation5 + $0x68] sm:$0xff]
    %v103 = vld [vmem:[#allocation5 + $0x70] sm:$0xff]
    %v104 = vld [vmem:[#allocation5 + $0x78] sm:$0xff]
    %v105 = vld [vmem:[%s2] sm:$0x1]
    %v106 = vpack.c.bf16 %v88, %v88
    %v107 = vpack.c.bf16 %v90, %v89
    %v108 = vpack.c.bf16 %v92, %v91
    %v109 = vpack.c.bf16 %v94, %v93
    %v110 = vpack.c.bf16 %v96, %v95
    %v111 = vpack.c.bf16 %v98, %v97
    %v112 = vpack.c.bf16 %v100, %v99
    %v113 = vpack.c.bf16 %v102, %v101
    %v114 = vpack.c.bf16 %v104, %v103
    %v116 = vperm.slane %v105, 0
    %118 = vmatpush.bf16.msra.mxu0 %v114
    %119 = vmatpush.bf16.msra.mxu0 %v113
    %120 = vmatpush.bf16.msra.mxu0 %v112
    %121 = vmatpush.bf16.msra.mxu0 %v111
    %122 = vmatpush.bf16.msra.mxu0 %v110
    %123 = vmatpush.bf16.msra.mxu0 %v109
    %124 = vmatpush.bf16.msra.mxu0 %v108
    %125 = vmatpush.bf16.msra.mxu0 %v107
    %126 = vmatmul.bf16.gmra.mxu0 %v106
    %v127 = vpop.f32.mrf.mxu0
    %v128 = vadd.f32 %v116, %v127
    %v129 = vpop.f32.mrf.mxu0
    %130 = vdwg.mxu0
    %vm131 = vcmp.ge.f32.partialorder %v128, 0.0
    %v132 = vmul.f32 %v128, 0.01
    %v133 = vsel %vm131, %v128, %v132
    %v134 = vld [vmem:[#allocation7] sm:$0xff]
    %v135 = vld [vmem:[#allocation7 + $0x8] sm:$0xff]
    %v136 = vld [vmem:[#allocation7 + $0x10] sm:$0xff]
    %v137 = vld [vmem:[#allocation7 + $0x18] sm:$0xff]
    %v138 = vld [vmem:[#allocation7 + $0x20] sm:$0xff]
    %v139 = vld [vmem:[#allocation7 + $0x28] sm:$0xff]
    %v140 = vld [vmem:[#allocation7 + $0x30] sm:$0xff]
    %v141 = vld [vmem:[#allocation7 + $0x38] sm:$0xff]
    %v142 = vld [vmem:[#allocation7 + $0x40] sm:$0xff]
    %v143 = vld [vmem:[#allocation7 + $0x48] sm:$0xff]
    %v144 = vld [vmem:[#allocation7 + $0x50] sm:$0xff]
    %v145 = vld [vmem:[#allocation7 + $0x58] sm:$0xff]
    %v146 = vld [vmem:[#allocation7 + $0x60] sm:$0xff]
    %v147 = vld [vmem:[#allocation7 + $0x68] sm:$0xff]
    %v148 = vld [vmem:[#allocation7 + $0x70] sm:$0xff]
    %v149 = vld [vmem:[#allocation7 + $0x78] sm:$0xff]
    %v150 = vld [vmem:[%s4] sm:$0x1]
    %v151 = vpack.c.bf16 %v133, %v133
    %v152 = vpack.c.bf16 %v135, %v134
    %v153 = vpack.c.bf16 %v137, %v136
    %v154 = vpack.c.bf16 %v139, %v138
    %v155 = vpack.c.bf16 %v141, %v140
    %v156 = vpack.c.bf16 %v143, %v142
    %v157 = vpack.c.bf16 %v145, %v144
    %v158 = vpack.c.bf16 %v147, %v146
    %v159 = vpack.c.bf16 %v149, %v148
    %v161 = vperm.slane %v150, 0
    %163 = vmatpush.bf16.msra.mxu0 %v159
    %164 = vmatpush.bf16.msra.mxu0 %v158
    %165 = vmatpush.bf16.msra.mxu0 %v157
    %166 = vmatpush.bf16.msra.mxu0 %v156
    %167 = vmatpush.bf16.msra.mxu0 %v155
    %168 = vmatpush.bf16.msra.mxu0 %v154
    %169 = vmatpush.bf16.msra.mxu0 %v153
    %170 = vmatpush.bf16.msra.mxu0 %v152
    %171 = vmatmul.bf16.gmra.mxu0 %v151
    %v172 = vpop.f32.mrf.mxu0
    %v173 = vadd.f32 %v161, %v172
    %v174 = vpop.f32.mrf.mxu0
    %175 = vdwg.mxu0
    %vm176 = vcmp.ge.f32.partialorder %v173, 0.0
    %v177 = vmul.f32 %v173, 0.01
    %v178 = vsel %vm176, %v173, %v177
    %v179 = vld [vmem:[#allocation8] sm:$0xff]
    %v180 = vld [vmem:[#allocation8 + $0x8] sm:$0xff]
    %v181 = vld [vmem:[#allocation8 + $0x10] sm:$0xff]
    %v182 = vld [vmem:[#allocation8 + $0x18] sm:$0xff]
    %v183 = vld [vmem:[#allocation8 + $0x20] sm:$0xff]
    %v184 = vld [vmem:[#allocation8 + $0x28] sm:$0xff]
    %v185 = vld [vmem:[#allocation8 + $0x30] sm:$0xff]
    %v186 = vld [vmem:[#allocation8 + $0x38] sm:$0xff]
    %v187 = vld [vmem:[#allocation8 + $0x40] sm:$0xff]
    %v188 = vld [vmem:[#allocation8 + $0x48] sm:$0xff]
    %v189 = vld [vmem:[#allocation8 + $0x50] sm:$0xff]
    %v190 = vld [vmem:[#allocation8 + $0x58] sm:$0xff]
    %v191 = vld [vmem:[#allocation8 + $0x60] sm:$0xff]
    %v192 = vld [vmem:[#allocation8 + $0x68] sm:$0xff]
    %v193 = vld [vmem:[#allocation8 + $0x70] sm:$0xff]
    %v194 = vld [vmem:[#allocation8 + $0x78] sm:$0xff]
    %v195 = vld [vmem:[%s6] sm:$0x1]
    %v196 = vpack.c.bf16 %v178, %v178
    %v197 = vpack.c.bf16 %v180, %v179
    %v198 = vpack.c.bf16 %v182, %v181
    %v199 = vpack.c.bf16 %v184, %v183
    %v200 = vpack.c.bf16 %v186, %v185
    %v201 = vpack.c.bf16 %v188, %v187
    %v202 = vpack.c.bf16 %v190, %v189
    %v203 = vpack.c.bf16 %v192, %v191
    %v204 = vpack.c.bf16 %v194, %v193
    %v206 = vperm.slane %v195, 0
    %208 = vmatpush.bf16.msra.mxu0 %v204
    %209 = vmatpush.bf16.msra.mxu0 %v203
    %210 = vmatpush.bf16.msra.mxu0 %v202
    %211 = vmatpush.bf16.msra.mxu0 %v201
    %212 = vmatpush.bf16.msra.mxu0 %v200
    %213 = vmatpush.bf16.msra.mxu0 %v199
    %214 = vmatpush.bf16.msra.mxu0 %v198
    %215 = vmatpush.bf16.msra.mxu0 %v197
    %216 = vmatmul.bf16.gmra.mxu0 %v196
    %v217 = vpop.f32.mrf.mxu0
    %v218 = vadd.f32 %v206, %v217
    %v219 = vpop.f32.mrf.mxu0
    %220 = vdwg.mxu0
    %vm221 = vcmp.ge.f32.partialorder %v218, 0.0
    %v222 = vmul.f32 %v218, 0.01
    %v223 = vsel %vm221, %v218, %v222
    %224 = vst [vmem:[#allocation10] sm:$0xff] %v223
    // Predicated region
    $region46: #{tpu_custom_call.1} parent=1 // pred_check
      _
    $region47: #{tpu_custom_call.1} parent=1 // pred_check_branch
      %226 = sbr.rel (0) target = $region49
    $region48: #{tpu_custom_call.1} parent=1 // pred_region
      %228 = vsyncadd [#allocation4], 0
      %s230 = sshll.u32 [#allocation10], 4
      %s231 = int_to_ptr.vmem [resolvable:$true] %s230
      %s232 = sshll.u32 %s7, 4
      %s233 = int_to_ptr.hbm [resolvable:$true] %s232
      %235 = dma.vmem_to_hbm [thread:$0]  %s231, 128, %s233, [#allocation4]
    $region49: #{tpu_custom_call.1} parent=1 // pred_fallthru
      _
    // Predicated region
    $region50: #{tpu_custom_call.1} parent=1 // pred_check
      _
    $region51: #{tpu_custom_call.1} parent=1 // pred_check_branch
      %237 = sbr.rel (0) target = $region53
    $region52: #{tpu_custom_call.1} parent=1 // pred_region
      %239 = dma.done [#allocation4], 128
    $region53: #{tpu_custom_call.1} parent=1 // pred_fallthru
      _
    %240 = vsyncpa [#allocation3], 1
    %241 = vsyncpa [#allocation6], 1
    %242 = vsyncpa [#allocation9], 1
    %243 = vsyncpa [#allocation4], 1

</llo_original>
